<compile_context>
chip_gen: v5e
topology: v5e:2x2
jax: 0.10.0
libtpu: 0.0.40
codegen_flags: <defaults>
</compile_context>

<pallas_src>
import jax
import jax.numpy as jnp
from jax.experimental import pallas as pl
from jax.experimental.pallas import tpu as pltpu

_MIB = 1024 * 1024


# --------------------------------------------------------------------------
# Kernels
# --------------------------------------------------------------------------
def _fused_se_kernel(x_ref, w1_ref, b1_ref, w2_ref, b2_ref, o_ref):
    """One batch per grid step: squeeze + excite + scale, all in VMEM.

    x_ref/o_ref: (1, C, S)        w1_ref: (Cr, C)   b1_ref: (Cr, 1)
                                  w2_ref: (C, Cr)   b2_ref: (C, 1)
    """
    x = x_ref[0]                                                    # (C, S)
    inv_s = 1.0 / x.shape[1]
    # f32 accumulation without materializing an f32 copy of the slab.
    m = jnp.sum(x, axis=1, dtype=jnp.float32, keepdims=True) * inv_s  # (C, 1)
    # Excitation in column form with the PyTorch (out, in) weight layout.
    h = jnp.dot(w1_ref[...], m, preferred_element_type=jnp.float32)   # (Cr, 1)
    h = jnp.maximum(h + b1_ref[...], 0.0)                             # ReLU
    z = jnp.dot(w2_ref[...], h, preferred_element_type=jnp.float32)   # (C, 1)
    g = jax.nn.sigmoid(z + b2_ref[...])                               # (C, 1)
    # Scale; gate cast so the big tile stays in x's dtype (bf16 stays bf16).
    o_ref[0] = x * g.astype(x.dtype)


def _squeeze_mean_kernel(x_ref, m_ref):
    # x_ref: (TILE_R, S) tile of the (B*C, H*W) view;  m_ref: (TILE_R, 1) f32
    inv_s = 1.0 / x_ref.shape[1]
    m_ref[...] = (
        jnp.sum(x_ref[...], axis=1, dtype=jnp.float32, keepdims=True) * inv_s
    )


def _scale_kernel(x_ref, g_ref, o_ref):
    # x_ref: (TILE_R, S)  g_ref: (TILE_R, 1)  o_ref: (TILE_R, S)
    o_ref[...] = x_ref[...] * g_ref[...].astype(x_ref.dtype)


# --------------------------------------------------------------------------
# Sizing helpers (lane/sublane padding aware)
# --------------------------------------------------------------------------
def _padded_tile_bytes(rows, cols, itemsize):
    """VMEM footprint of one (rows, cols) buffer after lane/sublane padding."""
    lane = pl.cdiv(cols, 128) * 128
    sub = 8 * max(1, 4 // itemsize)          # 8 (f32) / 16 (bf16) / 32 (int8)
    return pl.cdiv(rows, sub) * sub * lane * itemsize


def _pick_tile_rows(rows, padded_row_bytes, max_tile_bytes=8 * _MIB):
    """Largest multiple-of-8 row tile under the byte budget.  No divisibility
    requirement (pl.cdiv grid handles ragged edge blocks); capped so the
    parallel grid axis gets >=2 steps whenever rows allows (v7x megacore)."""
    if rows < 8:
        return rows                          # block == full dim (always legal)
    t = max(8, (max_tile_bytes // max(1, padded_row_bytes)) // 8 * 8)
    half = (rows // 2) // 8 * 8              # keep at least two grid steps
    if half >= 8:
        t = min(t, half)
    return min(t, (rows // 8) * 8)


def _vmem_limit(working_set_bytes):
    """Scoped-VMEM cap: enough for the double-buffered working set + slack,
    but <= 48 MiB so it is safe on v7x (64 MiB physical) and still raises
    v5e's 16 MiB default."""
    return int(min(48 * _MIB, max(32 * _MIB, working_set_bytes + 4 * _MIB)))


# --------------------------------------------------------------------------
# Wrapper
# --------------------------------------------------------------------------
def se_layer(x, fc1_w, fc1_b, fc2_w, fc2_b, *, force_two_pass=False):
    """x: (B, C, H, W).  fc1_w: (Cr, C), fc1_b: (Cr,), fc2_w: (C, Cr),
    fc2_b: (C,)  (PyTorch nn.Linear weight layout).  Returns (B, C, H, W)."""
    B, C, H, W = x.shape
    S = H * W
    Cr = fc1_w.shape[0]
    itemsize = jnp.dtype(x.dtype).itemsize

    w1 = fc1_w.astype(jnp.float32)
    b1c = fc1_b.astype(jnp.float32).reshape(Cr, 1)
    w2 = fc2_w.astype(jnp.float32)
    b2c = fc2_b.astype(jnp.float32).reshape(C, 1)

    # ---------------- fused single-pass path (preferred) -------------------
    # Working set per grid step: double-buffered input slab + double-buffered
    # output slab (weights are tiny).  Guard against VMEM overflow and make
    # sure the parallel axis has >=2 steps (two v7x TensorCores).
    slab_bytes = _padded_tile_bytes(C, S, itemsize)
    weight_bytes = 4 * (Cr * C + C * Cr + Cr + C)
    fused_need = 4 * slab_bytes + 2 * weight_bytes
    use_fused = (not force_two_pass) and (B >= 2) and (fused_need <= 40 * _MIB)

    if use_fused:
        x3 = x.reshape(B, C, S)                  # free reshape, lanes = H*W
        out3 = pl.pallas_call(
            _fused_se_kernel,
            out_shape=jax.ShapeDtypeStruct((B, C, S), x.dtype),
            grid_spec=pltpu.PrefetchScalarGridSpec(
                num_scalar_prefetch=0,
                grid=(B,),
                in_specs=[
                    pl.BlockSpec((1, C, S), lambda b: (b, 0, 0)),   # x slab
                    pl.BlockSpec((Cr, C), lambda b: (0, 0)),        # fc1 W
                    pl.BlockSpec((Cr, 1), lambda b: (0, 0)),        # fc1 b
                    pl.BlockSpec((C, Cr), lambda b: (0, 0)),        # fc2 W
                    pl.BlockSpec((C, 1), lambda b: (0, 0)),         # fc2 b
                ],
                out_specs=pl.BlockSpec((1, C, S), lambda b: (b, 0, 0)),
            ),
            compiler_params=pltpu.CompilerParams(
                dimension_semantics=("parallel",),
                vmem_limit_bytes=_vmem_limit(fused_need),
            ),
        )(x3, w1, b1c, w2, b2c)
        return out3.reshape(B, C, H, W)

    # ---------------- fallback: two streaming passes ------------------------
    rows = B * C
    x2 = x.reshape(rows, S)                      # lane axis = H*W (free reshape)
    padded_row_bytes = pl.cdiv(S, 128) * 128 * itemsize
    tile_r = _pick_tile_rows(rows, padded_row_bytes)
    grid_r = pl.cdiv(rows, tile_r)
    tile_bytes = _padded_tile_bytes(tile_r, S, itemsize)
    stream_limit = _vmem_limit(4 * tile_bytes)

    # pass 1: per-(b, c) mean over spatial
    means = pl.pallas_call(
        _squeeze_mean_kernel,
        out_shape=jax.ShapeDtypeStruct((rows, 1), jnp.float32),
        grid_spec=pltpu.PrefetchScalarGridSpec(
            num_scalar_prefetch=0,
            grid=(grid_r,),
            in_specs=[pl.BlockSpec((tile_r, S), lambda i: (i, 0))],
            out_specs=pl.BlockSpec((tile_r, 1), lambda i: (i, 0)),
        ),
        compiler_params=pltpu.CompilerParams(
            dimension_semantics=("parallel",),
            vmem_limit_bytes=stream_limit,
        ),
    )(x2)

    # excitation: (B, C) tensor -> plain jnp (removing the old serialized
    # grid=(B,) N=1-matmul pallas_call, per perf review).
    m = means.reshape(B, C)
    h = jnp.maximum(m @ w1.T + fc1_b.astype(jnp.float32), 0.0)          # (B, Cr)
    gate = jax.nn.sigmoid(h @ w2.T + fc2_b.astype(jnp.float32))         # (B, C)
    gate_rows = gate.reshape(rows, 1)

    # pass 2: out = x * gate (broadcast over spatial)
    out2 = pl.pallas_call(
        _scale_kernel,
        out_shape=jax.ShapeDtypeStruct((rows, S), x.dtype),
        grid_spec=pltpu.PrefetchScalarGridSpec(
            num_scalar_prefetch=0,
            grid=(grid_r,),
            in_specs=[
                pl.BlockSpec((tile_r, S), lambda i: (i, 0)),
                pl.BlockSpec((tile_r, 1), lambda i: (i, 0)),
            ],
            out_specs=pl.BlockSpec((tile_r, S), lambda i: (i, 0)),
        ),
        compiler_params=pltpu.CompilerParams(
            dimension_semantics=("parallel",),
            vmem_limit_bytes=stream_limit,
        ),
    )(x2, gate_rows)

    return out2.reshape(B, C, H, W)


# --------------------------------------------------------------------------
# Test
# --------------------------------------------------------------------------
if __name__ == "__main__":
    B, C, H, W = 2, 32, 16, 16
    reduction_ratio = 8
    Cr = C // reduction_ratio

    key = jax.random.PRNGKey(0)
    kx, k1, k2, k3, k4 = jax.random.split(key, 5)
    x = jax.random.normal(kx, (B, C, H, W), dtype=jnp.float32)

    # Deterministic params, PyTorch nn.Linear layout (weight: (out, in)).
    bound1 = 1.0 / (C ** 0.5)
    fc1_w = jax.random.uniform(k1, (Cr, C), jnp.float32, -bound1, bound1)
    fc1_b = jax.random.uniform(k2, (Cr,), jnp.float32, -bound1, bound1)
    bound2 = 1.0 / (Cr ** 0.5)
    fc2_w = jax.random.uniform(k3, (C, Cr), jnp.float32, -bound2, bound2)
    fc2_b = jax.random.uniform(k4, (C,), jnp.float32, -bound2, bound2)

    # Plain-JAX reference matching the PyTorch forward.
    sq = x.reshape(B, C, -1).mean(axis=2)                       # (B, C)
    h = jnp.maximum(sq @ fc1_w.T + fc1_b, 0.0)                  # (B, Cr)
    g = jax.nn.sigmoid(h @ fc2_w.T + fc2_b)                     # (B, C)
    ref = x * g.reshape(B, C, 1, 1)

    # Primary fused path.
    out_fused = jax.block_until_ready(se_layer(x, fc1_w, fc1_b, fc2_w, fc2_b))
    # Fallback two-pass path (exercised so both code paths are validated).
    out_2pass = jax.block_until_ready(
        se_layer(x, fc1_w, fc1_b, fc2_w, fc2_b, force_two_pass=True))

    assert out_fused.shape == x.shape
    assert jnp.allclose(out_fused, ref, atol=1e-5, rtol=1e-5)
    assert jnp.allclose(out_2pass, ref, atol=1e-5, rtol=1e-5)

    print("KERNEL_OK")
</pallas_src>

<mosaic_0001>
module attributes {stable_mosaic.version = 11 : i64} {
  func.func @_fused_se_kernel(%arg0: i32, %arg1: memref<1x32x256xf32, #tpu.memory_space<vmem>>, %arg2: memref<4x32xf32, #tpu.memory_space<vmem>>, %arg3: memref<4x1xf32, #tpu.memory_space<vmem>>, %arg4: memref<32x4xf32, #tpu.memory_space<vmem>>, %arg5: memref<32x1xf32, #tpu.memory_space<vmem>>, %arg6: memref<1x32x256xf32, #tpu.memory_space<vmem>>) attributes {dimension_semantics = [#tpu.dimension_semantics<parallel>], iteration_bounds = array<i64: 2>, scalar_prefetch = 0 : i64, scratch_operands = 0 : i64, tpu.core_type = #tpu.core_type<tc>, window_params = [{transform_indices = @transform_0, window_bounds = array<i64: 1, 32, 256>}, {pipeline_mode = #tpu.pipeline_mode<synchronous>, transform_indices = @transform_1, window_bounds = array<i64: 4, 32>}, {pipeline_mode = #tpu.pipeline_mode<synchronous>, transform_indices = @transform_2, window_bounds = array<i64: 4, 1>}, {pipeline_mode = #tpu.pipeline_mode<synchronous>, transform_indices = @transform_3, window_bounds = array<i64: 32, 4>}, {pipeline_mode = #tpu.pipeline_mode<synchronous>, transform_indices = @transform_4, window_bounds = array<i64: 32, 1>}, {transform_indices = @transform_5, window_bounds = array<i64: 1, 32, 256>}]} {
    %c0 = arith.constant 0 : index
    %c0_0 = arith.constant 0 : index
    %c0_1 = arith.constant 0 : index
    %0 = vector.load %arg1[%c0, %c0_0, %c0_1] : memref<1x32x256xf32, #tpu.memory_space<vmem>>, vector<1x32x256xf32>
    %1 = vector.shape_cast %0 : vector<1x32x256xf32> to vector<32x256xf32>
    %cst = arith.constant dense<0.000000e+00> : vector<32xf32>
    %2 = vector.multi_reduction <add>, %1, %cst [1] : vector<32x256xf32> to vector<32xf32>
    %3 = vector.shape_cast %2 : vector<32xf32> to vector<32x1xf32>
    %cst_2 = arith.constant 3.906250e-03 : f32
    %4 = vector.broadcast %cst_2 : f32 to vector<32x1xf32>
    %5 = arith.mulf %3, %4 : vector<32x1xf32>
    %c0_3 = arith.constant 0 : index
    %c0_4 = arith.constant 0 : index
    %6 = vector.load %arg2[%c0_3, %c0_4] : memref<4x32xf32, #tpu.memory_space<vmem>>, vector<4x32xf32>
    %cst_5 = arith.constant dense<0.000000e+00> : vector<4x1xf32>
    %7 = tpu.matmul %6, %5, %cst_5 {dimension_numbers = #tpu.dot_dimension_numbers<[1], [0], [0], [1], [0, 0, 1, 1], [], []>} : vector<4x32xf32>, vector<32x1xf32>, vector<4x1xf32> -> vector<4x1xf32>
    %c0_6 = arith.constant 0 : index
    %c0_7 = arith.constant 0 : index
    %8 = vector.load %arg3[%c0_6, %c0_7] : memref<4x1xf32, #tpu.memory_space<vmem>>, vector<4x1xf32>
    %9 = arith.addf %7, %8 : vector<4x1xf32>
    %cst_8 = arith.constant 0.000000e+00 : f32
    %10 = vector.broadcast %cst_8 : f32 to vector<4x1xf32>
    %11 = arith.maximumf %9, %10 : vector<4x1xf32>
    %c0_9 = arith.constant 0 : index
    %c0_10 = arith.constant 0 : index
    %12 = vector.load %arg4[%c0_9, %c0_10] : memref<32x4xf32, #tpu.memory_space<vmem>>, vector<32x4xf32>
    %cst_11 = arith.constant dense<0.000000e+00> : vector<32x1xf32>
    %13 = tpu.matmul %12, %11, %cst_11 {dimension_numbers = #tpu.dot_dimension_numbers<[1], [0], [0], [1], [0, 0, 1, 1], [], []>} : vector<32x4xf32>, vector<4x1xf32>, vector<32x1xf32> -> vector<32x1xf32>
    %c0_12 = arith.constant 0 : index
    %c0_13 = arith.constant 0 : index
    %14 = vector.load %arg5[%c0_12, %c0_13] : memref<32x1xf32, #tpu.memory_space<vmem>>, vector<32x1xf32>
    %15 = arith.addf %13, %14 : vector<32x1xf32>
    %16 = arith.negf %15 : vector<32x1xf32>
    %17 = math.exp %16 : vector<32x1xf32>
    %cst_14 = arith.constant 1.000000e+00 : f32
    %18 = vector.broadcast %cst_14 : f32 to vector<32x1xf32>
    %19 = arith.addf %18, %17 : vector<32x1xf32>
    %20 = arith.divf %18, %19 : vector<32x1xf32>
    %21 = vector.broadcast %20 : vector<32x1xf32> to vector<32x256xf32>
    %22 = arith.mulf %1, %21 : vector<32x256xf32>
    %c0_15 = arith.constant 0 : index
    %c0_16 = arith.constant 0 : index
    %c0_17 = arith.constant 0 : index
    %23 = vector.load %arg6[%c0_15, %c0_16, %c0_17] : memref<1x32x256xf32, #tpu.memory_space<vmem>>, vector<1x32x256xf32>
    %24 = vector.shape_cast %23 : vector<1x32x256xf32> to vector<32x256xf32>
    %25 = vector.shape_cast %22 : vector<32x256xf32> to vector<1x32x256xf32>
    tpu.vector_store %arg6[%c0_15, %c0_16, %c0_17], %25 {strides = array<i32>} : memref<1x32x256xf32, #tpu.memory_space<vmem>>, vector<1x32x256xf32>,
    return
  }
  func.func @transform_0(%arg0: i32) -> (i32, i32, i32) {
    %c0_i32 = arith.constant 0 : i32
    %c0_i32_0 = arith.constant 0 : i32
    %c0_i32_1 = arith.constant 0 : i32
    return %arg0, %c0_i32, %c0_i32_0 : i32, i32, i32
  }
  func.func @transform_1(%arg0: i32) -> (i32, i32) {
    %c0_i32 = arith.constant 0 : i32
    %c0_i32_0 = arith.constant 0 : i32
    %c0_i32_1 = arith.constant 0 : i32
    return %c0_i32, %c0_i32_0 : i32, i32
  }
  func.func @transform_2(%arg0: i32) -> (i32, i32) {
    %c0_i32 = arith.constant 0 : i32
    %c0_i32_0 = arith.constant 0 : i32
    %c0_i32_1 = arith.constant 0 : i32
    return %c0_i32, %c0_i32_0 : i32, i32
  }
  func.func @transform_3(%arg0: i32) -> (i32, i32) {
    %c0_i32 = arith.constant 0 : i32
    %c0_i32_0 = arith.constant 0 : i32
    %c0_i32_1 = arith.constant 0 : i32
    return %c0_i32, %c0_i32_0 : i32, i32
  }
  func.func @transform_4(%arg0: i32) -> (i32, i32) {
    %c0_i32 = arith.constant 0 : i32
    %c0_i32_0 = arith.constant 0 : i32
    %c0_i32_1 = arith.constant 0 : i32
    return %c0_i32, %c0_i32_0 : i32, i32
  }
  func.func @transform_5(%arg0: i32) -> (i32, i32, i32) {
    %c0_i32 = arith.constant 0 : i32
    %c0_i32_0 = arith.constant 0 : i32
    %c0_i32_1 = arith.constant 0 : i32
    return %arg0, %c0_i32, %c0_i32_0 : i32, i32, i32
  }
}

</mosaic_0001>

<llo_original>
// kernel: tpu_custom_call.1
$region0: #{tpu_custom_call.1}
  #allocation0 [shape = 'u32[]', space=smem, size = 0x4, offset = 0x4, fixed_abs, tag = 'smem constant byte address 0x4 - core index']
  #allocation1 [shape = 'u32[72,128]{1,0:T(1,128)}', space=vmem, size = 0x9000, scoped, tag = 'internal scratch']
  %s0 = inlined_call_operand.hbm [shape: f32[2,32,256], index: 0, kind: input, shape index: {}]
  %s1 = inlined_call_operand.vmem [shape: f32[4,32], index: 1, kind: input, shape index: {}]
  %s2 = inlined_call_operand.vmem [shape: f32[4,1], index: 2, kind: input, shape index: {}]
  %s3 = inlined_call_operand.vmem [shape: f32[32,4], index: 3, kind: input, shape index: {}]
  %s4 = inlined_call_operand.vmem [shape: f32[32,1], index: 4, kind: input, shape index: {}]
  %s5 = inlined_call_operand.hbm [shape: f32[2,32,256], index: 5, kind: output, shape index: {}]
  %s6 = sld [smem:[#allocation0]]
  $region57: #{tpu_custom_call.1} parent=0
    _
  %s8 = ssub.s32 1, %s6
  %s9 = scalar_select 0, %s8, %s6
  $region1: #{tpu_custom_call.1} parent=0
    #allocation2 [shape = 'u8[65536]{0}', space=vmem, size = 0x10000, scoped, tag = 'input window, operand 0']
    #allocation3 [shape = 's32[2]{0}', space=sflag, size = 0x8, scoped, tag = 'scoped memory for tpu_custom_call.1']
    #allocation4 [shape = 's32[2]{0}', space=sflag, size = 0x8, scoped, tag = 'scoped memory for tpu_custom_call.1']
    #allocation5 [shape = 'u8[65536]{0}', space=vmem, size = 0x10000, scoped, tag = 'output window, operand 0']
    %10 = vsyncpa [#allocation3], 0
    %s11 = scalar_lea.sflag [#allocation3], 1
    %12 = vsyncpa %s11, 0
    %13 = vsyncpa [#allocation4], 0
    %s14 = scalar_lea.sflag [#allocation4], 1
    %15 = vsyncpa %s14, 0
    loop: start=0, step=1, limit=4
    $region2: #{tpu_custom_call.1} parent=1 // loop_pre_header
      _
    $region3: #{tpu_custom_call.1} parent=1 // loop_header
      %s17 = sphi 0, %s21
      %p18 = scmp.ge.s32.totalorder %s17, 4
      %s27 = sphi 0, %s29
      %s30 = sphi 0, %s27
      %s31 = sphi 0, %s30
      %s47 = sphi 0, %s31
      %s51 = sphi 0, %s51
      %s53 = sphi 0, %s51
      %s54 = sphi 0, %s53
      %s68 = sphi 0, %s54
      %s72 = sphi 0, %s72
      %s74 = sphi 0, %s72
      %s75 = sphi 0, %s74
      %s89 = sphi 0, %s75
      %s93 = sphi 0, %s93
      %s95 = sphi 0, %s93
      %s96 = sphi 0, %s95
      %s110 = sphi 0, %s96
      %s114 = sphi 0, %s114
      %s116 = sphi 0, %s114
      %s117 = sphi 0, %s116
      %s131 = sphi 0, %s117
      %s137 = sphi 0, %s139
      %s140 = sphi 0, %s137
      %s141 = sphi 0, %s140
      %s157 = sphi 0, %s141
    $region4: #{tpu_custom_call.1} parent=1 // loop_header_branch
      %20 = sbr.rel (%p18) target = $region8
    $region5: #{tpu_custom_call.1} parent=1 // loop_body
      %s22 = ssub.s32 %s17, 1
      %s23 = ssub.s32 %s17, 2
      %s24 = sadd.s32 %s17, 1
      %s25 = ssub.s32 %s17, %s24
      %p26 = scmp.eq.s32.totalorder %s25, 0
      %s28 = sadd.s32 %s27, 1
      %s29 = scalar_select %p26, %s27, %s28
      %p32 = pneg %p26
      %p33 = scmp.eq.s32.totalorder %s17, 1
      %p34 = por %p32, %p33
      %p35 = scmp.ne.s32.totalorder %s27, %s30
      %p36 = scmp.eq.s32.totalorder %s17, 0
      %p37 = por %p35, %p36
      %p38 = scmp.ne.s32.totalorder %s27, %s30
      %p39 = scmp.eq.s32.totalorder %s22, 1
      %p40 = por %p38, %p39
      %p41 = scmp.ne.s32.totalorder %s30, %s31
      %p42 = scmp.eq.s32.totalorder %s22, 0
      %p43 = por %p41, %p42
      %p44 = scmp.ne.s32.totalorder %s30, %s31
      %p45 = scmp.eq.s32.totalorder %s23, 1
      %p46 = por %p44, %p45
      %p48 = scmp.ne.s32.totalorder %s31, %s47
      %p49 = scmp.eq.s32.totalorder %s23, 0
      %p50 = por %p48, %p49
      %s52 = sadd.s32 %s51, 1
      %p55 = scmp.eq.s32.totalorder %s17, 1
      %p56 = scmp.ne.s32.totalorder %s51, %s53
      %p57 = scmp.eq.s32.totalorder %s17, 0
      %p58 = por %p56, %p57
      %p59 = scmp.ne.s32.totalorder %s51, %s53
      %p60 = scmp.eq.s32.totalorder %s22, 1
      %p61 = por %p59, %p60
      %p62 = scmp.ne.s32.totalorder %s53, %s54
      %p63 = scmp.eq.s32.totalorder %s22, 0
      %p64 = por %p62, %p63
      %p65 = scmp.ne.s32.totalorder %s53, %s54
      %p66 = scmp.eq.s32.totalorder %s23, 1
      %p67 = por %p65, %p66
      %p69 = scmp.ne.s32.totalorder %s54, %s68
      %p70 = scmp.eq.s32.totalorder %s23, 0
      %p71 = por %p69, %p70
      %s73 = sadd.s32 %s72, 1
      %p76 = scmp.eq.s32.totalorder %s17, 1
      %p77 = scmp.ne.s32.totalorder %s72, %s74
      %p78 = scmp.eq.s32.totalorder %s17, 0
      %p79 = por %p77, %p78
      %p80 = scmp.ne.s32.totalorder %s72, %s74
      %p81 = scmp.eq.s32.totalorder %s22, 1
      %p82 = por %p80, %p81
      %p83 = scmp.ne.s32.totalorder %s74, %s75
      %p84 = scmp.eq.s32.totalorder %s22, 0
      %p85 = por %p83, %p84
      %p86 = scmp.ne.s32.totalorder %s74, %s75
      %p87 = scmp.eq.s32.totalorder %s23, 1
      %p88 = por %p86, %p87
      %p90 = scmp.ne.s32.totalorder %s75, %s89
      %p91 = scmp.eq.s32.totalorder %s23, 0
      %p92 = por %p90, %p91
      %s94 = sadd.s32 %s93, 1
      %p97 = scmp.eq.s32.totalorder %s17, 1
      %p98 = scmp.ne.s32.totalorder %s93, %s95
      %p99 = scmp.eq.s32.totalorder %s17, 0
      %p100 = por %p98, %p99
      %p101 = scmp.ne.s32.totalorder %s93, %s95
      %p102 = scmp.eq.s32.totalorder %s22, 1
      %p103 = por %p101, %p102
      %p104 = scmp.ne.s32.totalorder %s95, %s96
      %p105 = scmp.eq.s32.totalorder %s22, 0
      %p106 = por %p104, %p105
      %p107 = scmp.ne.s32.totalorder %s95, %s96
      %p108 = scmp.eq.s32.totalorder %s23, 1
      %p109 = por %p107, %p108
      %p111 = scmp.ne.s32.totalorder %s96, %s110
      %p112 = scmp.eq.s32.totalorder %s23, 0
      %p113 = por %p111, %p112
      %s115 = sadd.s32 %s114, 1
      %p118 = scmp.eq.s32.totalorder %s17, 1
      %p119 = scmp.ne.s32.totalorder %s114, %s116
      %p120 = scmp.eq.s32.totalorder %s17, 0
      %p121 = por %p119, %p120
      %p122 = scmp.ne.s32.totalorder %s114, %s116
      %p123 = scmp.eq.s32.totalorder %s22, 1
      %p124 = por %p122, %p123
      %p125 = scmp.ne.s32.totalorder %s116, %s117
      %p126 = scmp.eq.s32.totalorder %s22, 0
      %p127 = por %p125, %p126
      %p128 = scmp.ne.s32.totalorder %s116, %s117
      %p129 = scmp.eq.s32.totalorder %s23, 1
      %p130 = por %p128, %p129
      %p132 = scmp.ne.s32.totalorder %s117, %s131
      %p133 = scmp.eq.s32.totalorder %s23, 0
      %p134 = por %p132, %p133
      %s135 = ssub.s32 %s17, %s24
      %p136 = scmp.eq.s32.totalorder %s135, 0
      %s138 = sadd.s32 %s137, 1
      %s139 = scalar_select %p136, %s137, %s138
      %p142 = pneg %p136
      %p143 = scmp.eq.s32.totalorder %s17, 1
      %p144 = por %p142, %p143
      %p145 = scmp.ne.s32.totalorder %s137, %s140
      %p146 = scmp.eq.s32.totalorder %s17, 0
      %p147 = por %p145, %p146
      %p148 = scmp.ne.s32.totalorder %s137, %s140
      %p149 = scmp.eq.s32.totalorder %s22, 1
      %p150 = por %p148, %p149
      %p151 = scmp.ne.s32.totalorder %s140, %s141
      %p152 = scmp.eq.s32.totalorder %s22, 0
      %p153 = por %p151, %p152
      %p154 = scmp.ne.s32.totalorder %s140, %s141
      %p155 = scmp.eq.s32.totalorder %s23, 1
      %p156 = por %p154, %p155
      %p158 = scmp.ne.s32.totalorder %s141, %s157
      %p159 = scmp.eq.s32.totalorder %s23, 0
      %p160 = por %p158, %p159
      %p161 = scmp.le.s32.totalorder 1, %s17
      %p162 = scmp.lt.s32.totalorder %s17, 3
      %p163 = pnand %p161, %p162
      %p164 = pneg %p163
      // Predicated region
      $region9: #{tpu_custom_call.1} parent=5 // pred_check
        _
      $region10: #{tpu_custom_call.1} parent=5 // pred_check_branch
        %166 = sbr.rel (%p163) target = $region12
      $region11: #{tpu_custom_call.1} parent=5 // pred_region
        %s167 = ssub.s32 %s17, 1
        // Predicated region
        $region13: #{tpu_custom_call.1} parent=11 // pred_check
          %p168 = pneg %p64
        $region14: #{tpu_custom_call.1} parent=11 // pred_check_branch
          %170 = sbr.rel (%p168) target = $region16
        $region15: #{tpu_custom_call.1} parent=11 // pred_region
          _
        $region16: #{tpu_custom_call.1} parent=11 // pred_fallthru
          _
        // Predicated region
        $region17: #{tpu_custom_call.1} parent=11 // pred_check
          %p171 = pneg %p85
        $region18: #{tpu_custom_call.1} parent=11 // pred_check_branch
          %173 = sbr.rel (%p171) target = $region20
        $region19: #{tpu_custom_call.1} parent=11 // pred_region
          _
        $region20: #{tpu_custom_call.1} parent=11 // pred_fallthru
          _
        // Predicated region
        $region21: #{tpu_custom_call.1} parent=11 // pred_check
          %p174 = pneg %p106
        $region22: #{tpu_custom_call.1} parent=11 // pred_check_branch
          %176 = sbr.rel (%p174) target = $region24
        $region23: #{tpu_custom_call.1} parent=11 // pred_region
          _
        $region24: #{tpu_custom_call.1} parent=11 // pred_fallthru
          _
        // Predicated region
        $region25: #{tpu_custom_call.1} parent=11 // pred_check
          %p177 = pneg %p127
        $region26: #{tpu_custom_call.1} parent=11 // pred_check_branch
          %179 = sbr.rel (%p177) target = $region28
        $region27: #{tpu_custom_call.1} parent=11 // pred_region
          _
        $region28: #{tpu_custom_call.1} parent=11 // pred_fallthru
          _
      $region12: #{tpu_custom_call.1} parent=5 // pred_fallthru
        _
      %p180 = scmp.lt.s32.totalorder %s17, 2
      // Predicated region
      $region29: #{tpu_custom_call.1} parent=5 // pred_check
        %p181 = pneg %p180
      $region30: #{tpu_custom_call.1} parent=5 // pred_check_branch
        %183 = sbr.rel (%p181) target = $region32
      $region31: #{tpu_custom_call.1} parent=5 // pred_region
        // Predicated region
        $region33: #{tpu_custom_call.1} parent=31 // pred_check
          %p184 = pneg %p37
        $region34: #{tpu_custom_call.1} parent=31 // pred_check_branch
          %186 = sbr.rel (%p184) target = $region36
        $region35: #{tpu_custom_call.1} parent=31 // pred_region
          %s187 = sand.u32 %s27, 1
          %s188 = scalar_lea.sflag [#allocation3], %s187
          %s189 = sand.u32 %s27, 1
          %s190 = smul.addr %s189, 64
          %s191 = scalar_lea.vmem [#allocation2], %s190
          %193 = vsyncadd %s188, 0
          %s194 = smul.addr %s17, 8
          %s195 = smul.addr %s194, 8
          %s196 = scalar_lea.hbm %s0, %s195
          %s197 = sshll.u32 %s196, 4
          %s198 = int_to_ptr.hbm [resolvable:$true] %s197
          %s199 = sshll.u32 %s191, 4
          %s200 = int_to_ptr.vmem [resolvable:$true] %s199
          %205 = dma.hbm_to_vmem [thread:$0]  %s198, 1024, %s200, %s188, 256, 256, 16
        $region36: #{tpu_custom_call.1} parent=31 // pred_fallthru
          _
      $region32: #{tpu_custom_call.1} parent=5 // pred_fallthru
        _
      %p206 = scmp.le.s32.totalorder 1, %s17
      %p207 = scmp.lt.s32.totalorder %s17, 3
      %p208 = pnand %p206, %p207
      %p209 = pneg %p208
      // Predicated region
      $region37: #{tpu_custom_call.1} parent=5 // pred_check
        _
      $region38: #{tpu_custom_call.1} parent=5 // pred_check_branch
        %211 = sbr.rel (%p208) target = $region40
      $region39: #{tpu_custom_call.1} parent=5 // pred_region
        %s212 = ssub.s32 %s17, 1
        %s213 = sand.u32 %s30, 1
        %s214 = scalar_lea.sflag [#allocation3], %s213
        %s215 = sand.u32 %s30, 1
        %s216 = smul.addr %s215, 64
        %s217 = scalar_lea.vmem [#allocation2], %s216
        // Predicated region
        $region41: #{tpu_custom_call.1} parent=39 // pred_check
          %p218 = pneg %p43
        $region42: #{tpu_custom_call.1} parent=39 // pred_check_branch
          %220 = sbr.rel (%p218) target = $region44
        $region43: #{tpu_custom_call.1} parent=39 // pred_region
          %222 = dma.done %s214, 1024
        $region44: #{tpu_custom_call.1} parent=39 // pred_fallthru
          _
        %s223 = sand.u32 %s30, 1
        %s224 = scalar_lea.sflag [#allocation3], %s223
        %s225 = sand.u32 %s30, 1
        %s226 = smul.addr %s225, 64
        %s227 = scalar_lea.vmem [#allocation2], %s226
        %p228 = pneg %p43
        %p229 = pneg %p40
        %p230 = pneg %p64
        %p231 = pneg %p61
        %p232 = pneg %p85
        %p233 = pneg %p82
        %p234 = pneg %p106
        %p235 = pneg %p103
        %p236 = pneg %p127
        %p237 = pneg %p124
        %p238 = pneg %p153
        %p239 = pneg %p150
        %s240 = sand.u32 %s140, 1
        %s241 = scalar_lea.sflag [#allocation4], %s240
        %s242 = sand.u32 %s140, 1
        %s243 = smul.addr %s242, 64
        %s244 = scalar_lea.vmem [#allocation5], %s243
        %v245 = vld [vmem:[%s217] sm:$0xff]
        %v246 = vld [vmem:[%s217 + $0x8] sm:$0xff]
        %v247 = vld [vmem:[%s217 + $0x10] sm:$0xff]
        %v248 = vld [vmem:[%s217 + $0x18] sm:$0xff]
        %v249 = vld [vmem:[%s217 + $0x20] sm:$0xff]
        %v250 = vld [vmem:[%s217 + $0x28] sm:$0xff]
        %v251 = vld [vmem:[%s217 + $0x30] sm:$0xff]
        %v252 = vld [vmem:[%s217 + $0x38] sm:$0xff]
        %v253 = vadd.f32 %v245, %v246
        %254 = vadd.xlane.f32.xlu0 %v253
        %v255 = vpop.xlane.xlu0 %254
        %v256 = vadd.f32 %v247, %v248
        %257 = vadd.xlane.f32.xlu0 %v256
        %v258 = vpop.xlane.xlu0 %257
        %v259 = vadd.f32 %v249, %v250
        %260 = vadd.xlane.f32.xlu0 %v259
        %v261 = vpop.xlane.xlu0 %260
        %v262 = vadd.f32 %v251, %v252
        %263 = vadd.xlane.f32.xlu0 %v262
        %v264 = vpop.xlane.xlu0 %263
        %v265 = vmul.f32 %v255, 0.00390625
        %v266 = vmul.f32 %v258, 0.00390625
        %v267 = vmul.f32 %v261, 0.00390625
        %v268 = vmul.f32 %v264, 0.00390625
        %v269 = vld [vmem:[%s1] sm:$0xf]
        %v270 = vld [vmem:[%s2] sm:$0xf]
        %vm271 = vcmask 261120
        %v273 = vsel %vm271, %v269, 0
        %275 = vmatpush.msra.mxu0 0.0
        %276 = vmatpush.msra.mxu0 0.0
        %277 = vmatpush.msra.mxu0 0.0
        %278 = vmatpush.msra.mxu0 0.0
        %279 = vmatpush.msra.mxu0 0.0
        %280 = vmatpush.msra.mxu0 0.0
        %281 = vmatpush.msra.mxu0 0.0
        %282 = vmatpush.msra.mxu0 0.0
        %283 = vmatpush.msra.mxu0 0.0
        %284 = vmatpush.msra.mxu0 0.0
        %285 = vmatpush.msra.mxu0 0.0
        %286 = vmatpush.msra.mxu0 0.0
        %287 = vmatpush.msra.mxu0 %v268
        %288 = vmatpush.msra.mxu0 %v267
        %289 = vmatpush.msra.mxu0 %v266
        %290 = vmatpush.msra.mxu0 %v265
        %291 = vmatmul.f32.gmra.mxu0 %v273
        %v292 = vpop.f32.mrf.mxu0
        %v293 = vadd.f32 %v270, %v292
        %294 = vdwg.mxu0
        %v295 = vmax.f32 %v293, 0.0
        %v296 = vld [vmem:[%s3] sm:$0xff]
        %v297 = vld [vmem:[%s3 + $0x8] sm:$0xff]
        %v298 = vld [vmem:[%s3 + $0x10] sm:$0xff]
        %v299 = vld [vmem:[%s3 + $0x18] sm:$0xff]
        %v300 = vld [vmem:[%s4] sm:$0xff]
        %v301 = vld [vmem:[%s4 + $0x8] sm:$0xff]
        %v302 = vld [vmem:[%s4 + $0x10] sm:$0xff]
        %v303 = vld [vmem:[%s4 + $0x18] sm:$0xff]
        %vm304 = vcmask 31744
        %v306 = vsel %vm304, %v296, 0
        %v309 = vsel %vm304, %v297, 0
        %v312 = vsel %vm304, %v298, 0
        %v315 = vsel %vm304, %v299, 0
        %vm317 = vcmask 1043456
        %v319 = vsel %vm317, %v295, 0
        %321 = vmatpush.msra.mxu0 0.0
        %322 = vmatpush.msra.mxu0 0.0
        %323 = vmatpush.msra.mxu0 0.0
        %324 = vmatpush.msra.mxu0 0.0
        %325 = vmatpush.msra.mxu0 0.0
        %326 = vmatpush.msra.mxu0 0.0
        %327 = vmatpush.msra.mxu0 0.0
        %328 = vmatpush.msra.mxu0 0.0
        %329 = vmatpush.msra.mxu0 0.0
        %330 = vmatpush.msra.mxu0 0.0
        %331 = vmatpush.msra.mxu0 0.0
        %332 = vmatpush.msra.mxu0 0.0
        %333 = vmatpush.msra.mxu0 0.0
        %334 = vmatpush.msra.mxu0 0.0
        %335 = vmatpush.msra.mxu0 0.0
        %336 = vmatpush.msra.mxu0 %v319
        %337 = vmatmul.f32.gmra.mxu0 %v306
        %v338 = vpop.f32.mrf.mxu0
        %v339 = vadd.f32 %v300, %v338
        %340 = vmatmul.f32.gmra.mxu0 %v309
        %v341 = vpop.f32.mrf.mxu0
        %v342 = vadd.f32 %v301, %v341
        %343 = vmatmul.f32.gmra.mxu0 %v312
        %v344 = vpop.f32.mrf.mxu0
        %v345 = vadd.f32 %v302, %v344
        %346 = vmatmul.f32.gmra.mxu0 %v315
        %v347 = vpop.f32.mrf.mxu0
        %v348 = vadd.f32 %v303, %v347
        %349 = vdwg.mxu0
        %v350 = vxor.u32 %v339, 2147483648
        %v351 = vxor.u32 %v342, 2147483648
        %v352 = vxor.u32 %v345, 2147483648
        %v353 = vxor.u32 %v348, 2147483648
        %v354 = vmul.f32 %v350, 1.442695
        %v355 = vpow.pop %v354
        %v356 = vmul.f32 %v351, 1.442695
        %v357 = vpow.pop %v356
        %v358 = vmul.f32 %v352, 1.442695
        %v359 = vpow.pop %v358
        %v360 = vmul.f32 %v353, 1.442695
        %v361 = vpow.pop %v360
        %v362 = vadd.f32 %v355, 1.0
        %v363 = vadd.f32 %v357, 1.0
        %v364 = vadd.f32 %v359, 1.0
        %v365 = vadd.f32 %v361, 1.0
        %v366 = vrcp.pop %v362
        %v367 = vmul.f32 %v362, %v366
        %v368 = vsub.f32 1.0, %v367
        %v369 = vmul.f32 %v366, %v368
        %v370 = vadd.f32 %v366, %v369
        %vm371 = vweird.f32 %v362
        %vm372 = vweird.f32 %v366
        %vm373 = vmor %vm371, %vm372
        %v374 = vsel %vm373, %v366, %v370
        %v375 = vand.u32 2147483647, %v362
        %vm376 = vcmp.eq.f32.partialorder %v375, 8.507059e+37
        %v377 = vand.u32 %v362, 2147483648
        %v378 = vor.u32 1.1754944e-38, %v377
        %v379 = vsel %vm376, %v378, %v374
        %v380 = vmul.f32 1.0, %v379
        %v381 = vrcp.pop %v363
        %v382 = vmul.f32 %v363, %v381
        %v383 = vsub.f32 1.0, %v382
        %v384 = vmul.f32 %v381, %v383
        %v385 = vadd.f32 %v381, %v384
        %vm386 = vweird.f32 %v363
        %vm387 = vweird.f32 %v381
        %vm388 = vmor %vm386, %vm387
        %v389 = vsel %vm388, %v381, %v385
        %v390 = vand.u32 2147483647, %v363
        %vm391 = vcmp.eq.f32.partialorder %v390, 8.507059e+37
        %v392 = vand.u32 %v363, 2147483648
        %v393 = vor.u32 1.1754944e-38, %v392
        %v394 = vsel %vm391, %v393, %v389
        %v395 = vmul.f32 1.0, %v394
        %v396 = vrcp.pop %v364
        %v397 = vmul.f32 %v364, %v396
        %v398 = vsub.f32 1.0, %v397
        %v399 = vmul.f32 %v396, %v398
        %v400 = vadd.f32 %v396, %v399
        %vm401 = vweird.f32 %v364
        %vm402 = vweird.f32 %v396
        %vm403 = vmor %vm401, %vm402
        %v404 = vsel %vm403, %v396, %v400
        %v405 = vand.u32 2147483647, %v364
        %vm406 = vcmp.eq.f32.partialorder %v405, 8.507059e+37
        %v407 = vand.u32 %v364, 2147483648
        %v408 = vor.u32 1.1754944e-38, %v407
        %v409 = vsel %vm406, %v408, %v404
        %v410 = vmul.f32 1.0, %v409
        %v411 = vrcp.pop %v365
        %v412 = vmul.f32 %v365, %v411
        %v413 = vsub.f32 1.0, %v412
        %v414 = vmul.f32 %v411, %v413
        %v415 = vadd.f32 %v411, %v414
        %vm416 = vweird.f32 %v365
        %vm417 = vweird.f32 %v411
        %vm418 = vmor %vm416, %vm417
        %v419 = vsel %vm418, %v411, %v415
        %v420 = vand.u32 2147483647, %v365
        %vm421 = vcmp.eq.f32.partialorder %v420, 8.507059e+37
        %v422 = vand.u32 %v365, 2147483648
        %v423 = vor.u32 1.1754944e-38, %v422
        %v424 = vsel %vm421, %v423, %v419
        %v425 = vmul.f32 1.0, %v424
        %427 = vset.pattern.permute.xlu0 0
        %428 = vperm.xlu0 %427, %v380
        %v429 = vpop.permute.xlu0 %428
        %432 = vset.pattern.permute.xlu0 0
        %433 = vperm.xlu0 %432, %v395
        %v434 = vpop.permute.xlu0 %433
        %437 = vset.pattern.permute.xlu0 0
        %438 = vperm.xlu0 %437, %v410
        %v439 = vpop.permute.xlu0 %438
        %442 = vset.pattern.permute.xlu0 0
        %443 = vperm.xlu0 %442, %v425
        %v444 = vpop.permute.xlu0 %443
        %v446 = vmul.f32 %v245, %v429
        %v447 = vmul.f32 %v246, %v429
        %v448 = vmul.f32 %v247, %v434
        %v449 = vmul.f32 %v248, %v434
        %v450 = vmul.f32 %v249, %v439
        %v451 = vmul.f32 %v250, %v439
        %v452 = vmul.f32 %v251, %v444
        %v453 = vmul.f32 %v252, %v444
        %454 = vst [vmem:[%s244] sm:$0xff] %v446
        %455 = vst [vmem:[%s244 + $0x8] sm:$0xff] %v447
        %456 = vst [vmem:[%s244 + $0x10] sm:$0xff] %v448
        %457 = vst [vmem:[%s244 + $0x18] sm:$0xff] %v449
        %458 = vst [vmem:[%s244 + $0x20] sm:$0xff] %v450
        %459 = vst [vmem:[%s244 + $0x28] sm:$0xff] %v451
        %460 = vst [vmem:[%s244 + $0x30] sm:$0xff] %v452
        %461 = vst [vmem:[%s244 + $0x38] sm:$0xff] %v453
        %s462 = sand.u32 %s140, 1
        %s463 = scalar_lea.sflag [#allocation4], %s462
        %s464 = sand.u32 %s140, 1
        %s465 = smul.addr %s464, 64
        %s466 = scalar_lea.vmem [#allocation5], %s465
        // Predicated region
        $region45: #{tpu_custom_call.1} parent=39 // pred_check
          %p467 = pneg %p150
        $region46: #{tpu_custom_call.1} parent=39 // pred_check_branch
          %469 = sbr.rel (%p467) target = $region48
        $region47: #{tpu_custom_call.1} parent=39 // pred_region
          %471 = vsyncadd %s463, 0
          %s472 = smul.addr %s22, 8
          %s473 = smul.addr %s472, 8
          %s474 = scalar_lea.hbm %s5, %s473
          %s475 = sshll.u32 %s466, 4
          %s476 = int_to_ptr.vmem [resolvable:$true] %s475
          %s477 = sshll.u32 %s474, 4
          %s478 = int_to_ptr.hbm [resolvable:$true] %s477
          %483 = dma.vmem_to_hbm [thread:$0]  %s476, 1024, %s478, %s463, 256, 256, 16
        $region48: #{tpu_custom_call.1} parent=39 // pred_fallthru
          _
      $region40: #{tpu_custom_call.1} parent=5 // pred_fallthru
        _
      %p484 = scmp.le.s32.totalorder 2, %s17
      // Predicated region
      $region49: #{tpu_custom_call.1} parent=5 // pred_check
        %p485 = pneg %p484
      $region50: #{tpu_custom_call.1} parent=5 // pred_check_branch
        %487 = sbr.rel (%p485) target = $region52
      $region51: #{tpu_custom_call.1} parent=5 // pred_region
        %s488 = ssub.s32 %s17, 2
        // Predicated region
        $region53: #{tpu_custom_call.1} parent=51 // pred_check
          %p489 = pneg %p156
        $region54: #{tpu_custom_call.1} parent=51 // pred_check_branch
          %491 = sbr.rel (%p489) target = $region56
        $region55: #{tpu_custom_call.1} parent=51 // pred_region
          %s492 = sand.u32 %s141, 1
          %s493 = scalar_lea.sflag [#allocation4], %s492
          %s494 = sand.u32 %s141, 1
          %s495 = smul.addr %s494, 64
          %s496 = scalar_lea.vmem [#allocation5], %s495
          %498 = dma.done %s493, 1024
        $region56: #{tpu_custom_call.1} parent=51 // pred_fallthru
          _
      $region52: #{tpu_custom_call.1} parent=5 // pred_fallthru
        _
    $region6: #{tpu_custom_call.1} parent=1 // loop_footer
      %s21 = sadd.s32 1, %s17
    $region7: #{tpu_custom_call.1} parent=1 // loop_footer_branch
      %16 = sbr.rel target = $region3
    $region8: #{tpu_custom_call.1} parent=1 // loop_exit
      _
    %499 = vsyncpa [#allocation3], 1
    %s500 = scalar_lea.sflag [#allocation3], 1
    %501 = vsyncpa %s500, 1
    %502 = vsyncpa [#allocation4], 1
    %s503 = scalar_lea.sflag [#allocation4], 1
    %504 = vsyncpa %s503, 1

</llo_original>
